<compile_context>
chip_gen: v7x
topology: tpu7x:2x2x1
jax: 0.10.0
libtpu: 0.0.40
codegen_flags: <defaults>
</compile_context>

<pallas_src>
import functools

import jax
import jax.numpy as jnp
from jax.experimental import pallas as pl
from jax.experimental.pallas import tpu as pltpu


def _mbstd_kernel(x_ref, o_ref, acc_ref, *, feat, n_in_blocks, tf, alpha,
                  inv_count):
    # x_ref:  (B, TF) source dtype   -- one lane tile of the flattened input
    # o_ref:  (B, TF) source dtype   -- matching tile of the (B, F+HW) output
    # acc_ref:(1, 1)  f32 VMEM       -- running sum of per-(c,h,w) std
    i = pl.program_id(0)

    @pl.when(i == 0)
    def _init():
        acc_ref[...] = jnp.zeros_like(acc_ref)

    x = x_ref[...]                                        # (B, TF)

    # Column indices of this output block; columns < feat belong to the x copy,
    # columns >= feat belong to the appended std-map channel.
    cols = i * tf + jax.lax.broadcasted_iota(jnp.int32, (1, tf), 1)
    in_x = cols < feat                                    # (1, TF) bool

    @pl.when(i < n_in_blocks)
    def _accumulate():
        xf = x.astype(jnp.float32)
        mean_b = jnp.mean(xf, axis=0, keepdims=True)      # (1, TF)
        centered = xf - mean_b
        var = jnp.mean(centered * centered, axis=0, keepdims=True)
        std = jnp.sqrt(var + alpha)                       # (1, TF)
        # Mask out padded / out-of-range columns before the lane reduction.
        acc_ref[...] += jnp.sum(jnp.where(in_x, std, 0.0), keepdims=True)

    # s is only consumed for columns >= feat, which first appear in (or after)
    # the last x block -- by then the accumulation above has completed.
    s = (acc_ref[...] * inv_count).astype(x.dtype)        # (1, 1)
    o_ref[...] = jnp.where(in_x, x, s)


def minibatch_stddev(x, alpha=1e-8):
    """x: (B, C, H, W) -> (B, C+1, H, W), matching PyTorch MinibatchStdDev."""
    B, C, H, W = x.shape
    hw = H * W
    feat = C * hw
    f_out = feat + hw

    LANE = 128
    x2d = x.reshape(B, feat)                              # free layout plumbing

    if feat >= LANE:
        # ~2 MiB of f32 compute per (B, TF) block, multiple of 128 lanes,
        # capped so the first input blocks are fully in range (only the last
        # one may straddle the array edge and is masked).
        tf_target = max(LANE, ((2 * 1024 * 1024) // (B * 4) // LANE) * LANE)
        f_cap = feat if feat % LANE == 0 else (feat // LANE) * LANE
        tf = min(tf_target, f_cap)
        n_in_blocks = pl.cdiv(feat, tf)
        x_in = x2d
    else:
        # Tiny-feature fallback: pad to the full output width and run one
        # untiled block (block shape == full array dims, so no (8,128)
        # alignment requirement). Padded columns are masked out in-kernel.
        tf = f_out
        n_in_blocks = 1
        x_in = jnp.pad(x2d, ((0, 0), (0, f_out - feat)))

    grid = (pl.cdiv(f_out, tf),)

    kernel = functools.partial(
        _mbstd_kernel,
        feat=feat,
        n_in_blocks=n_in_blocks,
        tf=tf,
        alpha=float(alpha),
        inv_count=1.0 / float(feat),
    )

    out2d = pl.pallas_call(
        kernel,
        out_shape=jax.ShapeDtypeStruct((B, f_out), x.dtype),
        grid_spec=pltpu.PrefetchScalarGridSpec(
            num_scalar_prefetch=0,
            grid=grid,
            in_specs=[
                pl.BlockSpec(
                    (B, tf),
                    # Clamp so the trailing std-only blocks re-use (and Pallas
                    # elides re-fetching) the last valid input block instead
                    # of reading out of range.
                    lambda i: (0, jnp.minimum(i, n_in_blocks - 1)),
                )
            ],
            out_specs=pl.BlockSpec((B, tf), lambda i: (0, i)),
            scratch_shapes=[pltpu.VMEM((1, 1), jnp.float32)],
        ),
        compiler_params=pltpu.CompilerParams(
            # Sequential scalar accumulation across the grid -> must stay
            # "arbitrary" (marking it parallel would race the accumulator).
            dimension_semantics=("arbitrary",),
            vmem_limit_bytes=48 * 1024 * 1024,
        ),
    )(x_in)

    return out2d.reshape(B, C + 1, H, W)


def _reference(x, alpha=1e-8):
    y = x - jnp.mean(x, axis=0, keepdims=True)
    y = jnp.sqrt(jnp.mean(y ** 2, axis=0) + alpha)
    s = jnp.mean(y)
    B, _, H, W = x.shape
    smap = jnp.full((B, 1, H, W), s, dtype=x.dtype)
    return jnp.concatenate([x, smap], axis=1)


if __name__ == "__main__":
    key = jax.random.PRNGKey(0)
    B, C, H, W = 2, 4, 16, 16
    x = jax.random.normal(key, (B, C, H, W), dtype=jnp.float32)

    out = minibatch_stddev(x)
    out = jax.block_until_ready(out)

    ref = _reference(x)
    assert out.shape == (B, C + 1, H, W)
    assert out.dtype == x.dtype
    assert jnp.allclose(out, ref, atol=1e-5, rtol=1e-5)

    print("KERNEL_OK")
</pallas_src>

<mosaic_0001>
module attributes {stable_mosaic.version = 11 : i64} {
  func.func @_mbstd_kernel(%arg0: i32, %arg1: memref<2x1024xf32, #tpu.memory_space<vmem>>, %arg2: memref<2x1024xf32, #tpu.memory_space<vmem>>, %arg3: memref<1x1xf32, #tpu.memory_space<vmem>>) attributes {dimension_semantics = [#tpu.dimension_semantics<arbitrary>], iteration_bounds = array<i64: 2>, scalar_prefetch = 0 : i64, scratch_operands = 1 : i64, tpu.core_type = #tpu.core_type<tc>, window_params = [{transform_indices = @transform_0, window_bounds = array<i64: 2, 1024>}, {transform_indices = @transform_1, window_bounds = array<i64: 2, 1024>}]} {
    %c0_i32 = arith.constant 0 : i32
    %0 = arith.cmpi eq, %arg0, %c0_i32 : i32
    %1 = arith.extui %0 : i1 to i32
    %c0_i32_0 = arith.constant 0 : i32
    %2 = arith.cmpi ne, %1, %c0_i32_0 : i32
    scf.if %2 {
      %cst_8 = arith.constant 0.000000e+00 : f32
      %22 = vector.broadcast %cst_8 : f32 to vector<1x1xf32>
      %c0_9 = arith.constant 0 : index
      %c0_10 = arith.constant 0 : index
      %23 = vector.load %arg3[%c0_9, %c0_10] : memref<1x1xf32, #tpu.memory_space<vmem>>, vector<1x1xf32>
      tpu.vector_store %arg3[%c0_9, %c0_10], %22 {strides = array<i32>} : memref<1x1xf32, #tpu.memory_space<vmem>>, vector<1x1xf32>,
    } else {
    }
    %c0 = arith.constant 0 : index
    %c0_1 = arith.constant 0 : index
    %3 = vector.load %arg1[%c0, %c0_1] : memref<2x1024xf32, #tpu.memory_space<vmem>>, vector<2x1024xf32>
    %c1024_i32 = arith.constant 1024 : i32
    %4 = arith.muli %arg0, %c1024_i32 : i32
    %5 = tpu.iota {dimensions = array<i32: 1>} : vector<1x1024xi32>
    %6 = vector.broadcast %4 : i32 to vector<1x1024xi32>
    %7 = arith.addi %6, %5 : vector<1x1024xi32>
    %c1024_i32_2 = arith.constant 1024 : i32
    %8 = vector.broadcast %c1024_i32_2 : i32 to vector<1x1024xi32>
    %9 = arith.cmpi slt, %7, %8 : vector<1x1024xi32>
    %c1_i32 = arith.constant 1 : i32
    %10 = arith.cmpi slt, %arg0, %c1_i32 : i32
    %11 = arith.extui %10 : i1 to i32
    %c0_i32_3 = arith.constant 0 : i32
    %12 = arith.cmpi ne, %11, %c0_i32_3 : i32
    scf.if %12 {
      %cst_8 = arith.constant dense<0.000000e+00> : vector<1024xf32>
      %22 = vector.multi_reduction <add>, %3, %cst_8 [0] : vector<2x1024xf32> to vector<1024xf32>
      %23 = vector.shape_cast %22 : vector<1024xf32> to vector<1x1024xf32>
      %cst_9 = arith.constant 2.000000e+00 : f32
      %24 = vector.broadcast %cst_9 : f32 to vector<1x1024xf32>
      %25 = arith.divf %23, %24 : vector<1x1024xf32>
      %26 = vector.broadcast %25 : vector<1x1024xf32> to vector<2x1024xf32>
      %27 = arith.subf %3, %26 : vector<2x1024xf32>
      %28 = arith.mulf %27, %27 : vector<2x1024xf32>
      %cst_10 = arith.constant dense<0.000000e+00> : vector<1024xf32>
      %29 = vector.multi_reduction <add>, %28, %cst_10 [0] : vector<2x1024xf32> to vector<1024xf32>
      %30 = vector.shape_cast %29 : vector<1024xf32> to vector<1x1024xf32>
      %cst_11 = arith.constant 2.000000e+00 : f32
      %31 = vector.broadcast %cst_11 : f32 to vector<1x1024xf32>
      %32 = arith.divf %30, %31 : vector<1x1024xf32>
      %cst_12 = arith.constant 9.99999993E-9 : f32
      %33 = vector.broadcast %cst_12 : f32 to vector<1x1024xf32>
      %34 = arith.addf %32, %33 : vector<1x1024xf32>
      %35 = math.sqrt %34 : vector<1x1024xf32>
      %c0_13 = arith.constant 0 : index
      %c0_14 = arith.constant 0 : index
      %36 = vector.load %arg3[%c0_13, %c0_14] : memref<1x1xf32, #tpu.memory_space<vmem>>, vector<1x1xf32>
      %cst_15 = arith.constant 0.000000e+00 : f32
      %37 = vector.broadcast %cst_15 : f32 to vector<1x1024xf32>
      %38 = arith.select %9, %35, %37 : vector<1x1024xi1>, vector<1x1024xf32>
      %39 = vector.shape_cast %38 : vector<1x1024xf32> to vector<1x1x1024xf32>
      %cst_16 = arith.constant dense<0.000000e+00> : vector<1xf32>
      %40 = vector.multi_reduction <add>, %39, %cst_16 [1, 2] : vector<1x1x1024xf32> to vector<1xf32>
      %41 = vector.shape_cast %40 : vector<1xf32> to vector<1x1x1xf32>
      %42 = vector.extract %41[0, 0, 0] : f32 from vector<1x1x1xf32>
      %43 = vector.broadcast %42 : f32 to vector<1x1xf32>
      %44 = arith.addf %36, %43 : vector<1x1xf32>
      %c0_17 = arith.constant 0 : index
      %c0_18 = arith.constant 0 : index
      %45 = vector.load %arg3[%c0_17, %c0_18] : memref<1x1xf32, #tpu.memory_space<vmem>>, vector<1x1xf32>
      tpu.vector_store %arg3[%c0_17, %c0_18], %44 {strides = array<i32>} : memref<1x1xf32, #tpu.memory_space<vmem>>, vector<1x1xf32>,
    } else {
    }
    %c0_4 = arith.constant 0 : index
    %c0_5 = arith.constant 0 : index
    %13 = vector.load %arg3[%c0_4, %c0_5] : memref<1x1xf32, #tpu.memory_space<vmem>>, vector<1x1xf32>
    %cst = arith.constant 9.765625E-4 : f32
    %14 = vector.broadcast %cst : f32 to vector<1x1xf32>
    %15 = arith.mulf %13, %14 : vector<1x1xf32>
    %16 = vector.shape_cast %9 : vector<1x1024xi1> to vector<1x1024xi1>
    %17 = vector.broadcast %16 : vector<1x1024xi1> to vector<2x1024xi1>
    %18 = vector.shape_cast %15 : vector<1x1xf32> to vector<1x1xf32>
    %19 = vector.broadcast %18 : vector<1x1xf32> to vector<2x1024xf32>
    %20 = arith.select %17, %3, %19 : vector<2x1024xi1>, vector<2x1024xf32>
    %c0_6 = arith.constant 0 : index
    %c0_7 = arith.constant 0 : index
    %21 = vector.load %arg2[%c0_6, %c0_7] : memref<2x1024xf32, #tpu.memory_space<vmem>>, vector<2x1024xf32>
    tpu.vector_store %arg2[%c0_6, %c0_7], %20 {strides = array<i32>} : memref<2x1024xf32, #tpu.memory_space<vmem>>, vector<2x1024xf32>,
    return
  }
  func.func @transform_0(%arg0: i32) -> (i32, i32) {
    %c0_i32 = arith.constant 0 : i32
    %0 = arith.minsi %arg0, %c0_i32 : i32
    %c0_i32_0 = arith.constant 0 : i32
    %c0_i32_1 = arith.constant 0 : i32
    return %c0_i32_0, %0 : i32, i32
  }
  func.func @transform_1(%arg0: i32) -> (i32, i32) {
    %c0_i32 = arith.constant 0 : i32
    %c0_i32_0 = arith.constant 0 : i32
    return %c0_i32, %arg0 : i32, i32
  }
}

</mosaic_0001>

<llo_original>
// kernel: tpu_custom_call.1
$region0: #{tpu_custom_call.1}
  #allocation0 [shape = 'u32[]', space=smem, size = 0x4, offset = 0x4, fixed_abs, tag = 'smem constant byte address 0x4 - core index']
  #allocation1 [shape = 'u32[144,128]{1,0:T(1,128)}', space=vmem, size = 0x12000, scoped, tag = 'internal scratch']
  #allocation2 [shape = 'f32[1,1]{1,0:T(1,128)}', space=vmem, size = 0x200, scoped, tag = 'scratch operand']
  %s0 = inlined_call_operand.hbm [shape: f32[2,1024], index: 0, kind: input, shape index: {}]
  %s1 = inlined_call_operand.hbm [shape: f32[2,1280], index: 1, kind: output, shape index: {}]
  %s2 = sld [smem:[#allocation0]]
  $region49: #{tpu_custom_call.1} parent=0
    _
  %s4 = ssub.s32 1, %s2
  %s5 = scalar_select 0, %s4, %s2
  $region1: #{tpu_custom_call.1} parent=0
    #allocation3 [shape = 'u8[16384]{0}', space=vmem, size = 0x4000, scoped, tag = 'input window, operand 0']
    #allocation4 [shape = 's32[2]{0}', space=sflag, size = 0x8, scoped, tag = 'scoped memory for tpu_custom_call.1']
    #allocation5 [shape = 's32[2]{0}', space=sflag, size = 0x8, scoped, tag = 'scoped memory for tpu_custom_call.1']
    #allocation6 [shape = 'u8[16384]{0}', space=vmem, size = 0x4000, scoped, tag = 'output window, operand 0']
    %6 = vsyncpa [#allocation4], 0
    %s7 = scalar_lea.sflag [#allocation4], 1
    %8 = vsyncpa %s7, 0
    %9 = vsyncpa [#allocation5], 0
    %s10 = scalar_lea.sflag [#allocation5], 1
    %11 = vsyncpa %s10, 0
    loop: start=0, step=1, limit=4
    $region2: #{tpu_custom_call.1} parent=1 // loop_pre_header
      _
    $region3: #{tpu_custom_call.1} parent=1 // loop_header
      %s13 = sphi 0, %s17
      %p14 = scmp.ge.s32.totalorder %s13, 4
      %s27 = sphi 0, %s29
      %s30 = sphi 0, %s27
      %s31 = sphi 0, %s30
      %s47 = sphi 0, %s31
      %s53 = sphi 0, %s55
      %s56 = sphi 0, %s53
      %s57 = sphi 0, %s56
      %s73 = sphi 0, %s57
    $region4: #{tpu_custom_call.1} parent=1 // loop_header_branch
      %16 = sbr.rel (%p14) target = $region8
    $region5: #{tpu_custom_call.1} parent=1 // loop_body
      %s18 = ssub.s32 %s13, 1
      %s19 = ssub.s32 %s13, 2
      %s20 = sadd.s32 %s13, 1
      %p21 = scmp.lt.s32.totalorder %s13, 0
      %s22 = scalar_select %p21, %s13, 0
      %p23 = scmp.lt.s32.totalorder %s20, 0
      %s24 = scalar_select %p23, %s20, 0
      %s25 = ssub.s32 %s22, %s24
      %p26 = scmp.eq.s32.totalorder %s25, 0
      %s28 = sadd.s32 %s27, 1
      %s29 = scalar_select %p26, %s27, %s28
      %p32 = pneg %p26
      %p33 = scmp.eq.s32.totalorder %s13, 1
      %p34 = por %p32, %p33
      %p35 = scmp.ne.s32.totalorder %s27, %s30
      %p36 = scmp.eq.s32.totalorder %s13, 0
      %p37 = por %p35, %p36
      %p38 = scmp.ne.s32.totalorder %s27, %s30
      %p39 = scmp.eq.s32.totalorder %s18, 1
      %p40 = por %p38, %p39
      %p41 = scmp.ne.s32.totalorder %s30, %s31
      %p42 = scmp.eq.s32.totalorder %s18, 0
      %p43 = por %p41, %p42
      %p44 = scmp.ne.s32.totalorder %s30, %s31
      %p45 = scmp.eq.s32.totalorder %s19, 1
      %p46 = por %p44, %p45
      %p48 = scmp.ne.s32.totalorder %s31, %s47
      %p49 = scmp.eq.s32.totalorder %s19, 0
      %p50 = por %p48, %p49
      %s51 = ssub.s32 %s13, %s20
      %p52 = scmp.eq.s32.totalorder %s51, 0
      %s54 = sadd.s32 %s53, 1
      %s55 = scalar_select %p52, %s53, %s54
      %p58 = pneg %p52
      %p59 = scmp.eq.s32.totalorder %s13, 1
      %p60 = por %p58, %p59
      %p61 = scmp.ne.s32.totalorder %s53, %s56
      %p62 = scmp.eq.s32.totalorder %s13, 0
      %p63 = por %p61, %p62
      %p64 = scmp.ne.s32.totalorder %s53, %s56
      %p65 = scmp.eq.s32.totalorder %s18, 1
      %p66 = por %p64, %p65
      %p67 = scmp.ne.s32.totalorder %s56, %s57
      %p68 = scmp.eq.s32.totalorder %s18, 0
      %p69 = por %p67, %p68
      %p70 = scmp.ne.s32.totalorder %s56, %s57
      %p71 = scmp.eq.s32.totalorder %s19, 1
      %p72 = por %p70, %p71
      %p74 = scmp.ne.s32.totalorder %s57, %s73
      %p75 = scmp.eq.s32.totalorder %s19, 0
      %p76 = por %p74, %p75
      %p77 = scmp.le.s32.totalorder 1, %s13
      %p78 = scmp.lt.s32.totalorder %s13, 3
      %p79 = pnand %p77, %p78
      %p80 = pneg %p79
      // Predicated region
      $region9: #{tpu_custom_call.1} parent=5 // pred_check
        _
      $region10: #{tpu_custom_call.1} parent=5 // pred_check_branch
        %82 = sbr.rel (%p79) target = $region12
      $region11: #{tpu_custom_call.1} parent=5 // pred_region
        %s83 = ssub.s32 %s13, 1
      $region12: #{tpu_custom_call.1} parent=5 // pred_fallthru
        _
      %p84 = scmp.lt.s32.totalorder %s13, 2
      // Predicated region
      $region13: #{tpu_custom_call.1} parent=5 // pred_check
        %p85 = pneg %p84
      $region14: #{tpu_custom_call.1} parent=5 // pred_check_branch
        %87 = sbr.rel (%p85) target = $region16
      $region15: #{tpu_custom_call.1} parent=5 // pred_region
        // Predicated region
        $region17: #{tpu_custom_call.1} parent=15 // pred_check
          %p88 = pneg %p37
        $region18: #{tpu_custom_call.1} parent=15 // pred_check_branch
          %90 = sbr.rel (%p88) target = $region20
        $region19: #{tpu_custom_call.1} parent=15 // pred_region
          %s91 = sand.u32 %s27, 1
          %s92 = scalar_lea.sflag [#allocation4], %s91
          %s93 = sand.u32 %s27, 1
          %s94 = smul.addr %s93, 16
          %s95 = scalar_lea.vmem [#allocation3], %s94
          %p96 = scmp.lt.s32.totalorder %s13, 0
          %s97 = scalar_select %p96, %s13, 0
          %s98 = smul.u32 8, %s97
          %s100 = ssub.s32 256, 256
          %101 = vsyncadd %s92, %s100
          %s102 = smul.addr %s98, 32
          %s103 = scalar_lea.hbm %s0, %s102
          %s105 = sshll.u32 %s95, 4
          %s106 = int_to_ptr.vmem [resolvable:$true] %s105
          %108 = dma.hbm_to_vmem [thread:$0]  %s103, 256, %s106, %s92
        $region20: #{tpu_custom_call.1} parent=15 // pred_fallthru
          _
      $region16: #{tpu_custom_call.1} parent=5 // pred_fallthru
        _
      %p109 = scmp.le.s32.totalorder 1, %s13
      %p110 = scmp.lt.s32.totalorder %s13, 3
      %p111 = pnand %p109, %p110
      %p112 = pneg %p111
      // Predicated region
      $region21: #{tpu_custom_call.1} parent=5 // pred_check
        _
      $region22: #{tpu_custom_call.1} parent=5 // pred_check_branch
        %114 = sbr.rel (%p111) target = $region24
      $region23: #{tpu_custom_call.1} parent=5 // pred_region
        %s115 = ssub.s32 %s13, 1
        %s116 = sand.u32 %s30, 1
        %s117 = scalar_lea.sflag [#allocation4], %s116
        %s118 = sand.u32 %s30, 1
        %s119 = smul.addr %s118, 16
        %s120 = scalar_lea.vmem [#allocation3], %s119
        // Predicated region
        $region25: #{tpu_custom_call.1} parent=23 // pred_check
          %p121 = pneg %p43
        $region26: #{tpu_custom_call.1} parent=23 // pred_check_branch
          %123 = sbr.rel (%p121) target = $region28
        $region27: #{tpu_custom_call.1} parent=23 // pred_region
          %124 = dma.done %s117, 256
        $region28: #{tpu_custom_call.1} parent=23 // pred_fallthru
          _
        %s125 = sand.u32 %s30, 1
        %s126 = scalar_lea.sflag [#allocation4], %s125
        %s127 = sand.u32 %s30, 1
        %s128 = smul.addr %s127, 16
        %s129 = scalar_lea.vmem [#allocation3], %s128
        %p130 = pneg %p43
        %p131 = pneg %p40
        %p132 = pneg %p69
        %p133 = pneg %p66
        %s134 = sand.u32 %s56, 1
        %s135 = scalar_lea.sflag [#allocation5], %s134
        %s136 = sand.u32 %s56, 1
        %s137 = smul.addr %s136, 16
        %s138 = scalar_lea.vmem [#allocation6], %s137
        %p139 = scmp.lt.s32.totalorder %s18, 0
        %s140 = scalar_select %p139, %s18, 0
        %s141 = smul.u32 8, %s140
        %s142 = smul.u32 8, %s18
        %s143 = ssub.s32 10, %s142
        %p144 = scmp.lt.s32.totalorder %s143, 8
        %s145 = scalar_select %p144, %s143, 8
        %s146 = smul.u32 32, %s145
        %p147 = scmp.eq.s32.totalorder %s18, 0
        // Predicated region
        $region29: #{tpu_custom_call.1} parent=23 // pred_check
          %p148 = pneg %p147
        $region30: #{tpu_custom_call.1} parent=23 // pred_check_branch
          %150 = sbr.rel (%p148) target = $region32
        $region31: #{tpu_custom_call.1} parent=23 // pred_region
          %vm151 = vcmask 0
          %152 = vst.msk [vmem:[#allocation2] sm:$0x1] %vm151, 0.0
        $region32: #{tpu_custom_call.1} parent=23 // pred_fallthru
          _
        %v153 = vld [vmem:[%s120] sm:$0xff]
        %v154 = vld [vmem:[%s120 + $0x8] sm:$0xff]
        %s155 = smul.u32 %s18, 1024
        %v156 = vlaneseq
        %v157 = vand.u32 %v156, 127
        %v158 = vadd.s32 %v157, 128
        %v159 = vadd.s32 %v157, 256
        %v160 = vadd.s32 %v157, 384
        %v161 = vadd.s32 %v157, 512
        %v162 = vadd.s32 %v157, 640
        %v163 = vadd.s32 %v157, 768
        %v164 = vadd.s32 %v157, 896
        %v165 = vstv %s155
        %v166 = vadd.s32 %v165, %v157
        %v167 = vadd.s32 %v165, %v158
        %v168 = vadd.s32 %v165, %v159
        %v169 = vadd.s32 %v165, %v160
        %v170 = vadd.s32 %v165, %v161
        %v171 = vadd.s32 %v165, %v162
        %v172 = vadd.s32 %v165, %v163
        %v173 = vadd.s32 %v165, %v164
        %vm174 = vcmp.lt.s32.totalorder %v166, 1024
        %vm175 = vcmp.lt.s32.totalorder %v167, 1024
        %vm176 = vcmp.lt.s32.totalorder %v168, 1024
        %vm177 = vcmp.lt.s32.totalorder %v169, 1024
        %vm178 = vcmp.lt.s32.totalorder %v170, 1024
        %vm179 = vcmp.lt.s32.totalorder %v171, 1024
        %vm180 = vcmp.lt.s32.totalorder %v172, 1024
        %vm181 = vcmp.lt.s32.totalorder %v173, 1024
        %p182 = scmp.lt.s32.totalorder %s18, 1
        // Predicated region
        $region33: #{tpu_custom_call.1} parent=23 // pred_check
          %p183 = pneg %p182
        $region34: #{tpu_custom_call.1} parent=23 // pred_check_branch
          %185 = sbr.rel (%p183) target = $region36
        $region35: #{tpu_custom_call.1} parent=23 // pred_region
          %v188 = vcombine.high %v153, %v153
          %v190 = vunpack.c.l.s4 1983009808
          %v191 = vunpack.c.0.s8 %v190
          %v192 = vlaneseq
          %v193 = vshrl.u32 %v192, 7
          %v194 = vsub.s32 %v191, %v193
          %v195 = vrot.slane %v153, %v194
          %v197 = vunpack.c.l.s4 1983009808
          %v198 = vunpack.c.0.s8 %v197
          %v199 = vlaneseq
          %v200 = vshrl.u32 %v199, 7
          %v201 = vsub.s32 %v198, %v200
          %v202 = vrot.slane %v188, %v201
          %v203 = vcombine.high %v195, %v195
          %v204 = vcombine.high %v202, %v202
          %v205 = vcombine.high %v154, %v154
          %v207 = vunpack.c.l.s4 1983009808
          %v208 = vunpack.c.0.s8 %v207
          %v209 = vlaneseq
          %v210 = vshrl.u32 %v209, 7
          %v211 = vsub.s32 %v208, %v210
          %v212 = vrot.slane %v154, %v211
          %v214 = vunpack.c.l.s4 1983009808
          %v215 = vunpack.c.0.s8 %v214
          %v216 = vlaneseq
          %v217 = vshrl.u32 %v216, 7
          %v218 = vsub.s32 %v215, %v217
          %v219 = vrot.slane %v205, %v218
          %v220 = vcombine.high %v212, %v212
          %v221 = vcombine.high %v219, %v219
          %vm230 = vcmask 1041408
          %v231 = vsel %vm230, %v195, 0.0
          %v232 = vrot.slane %v231, 4
          %v233 = vadd.f32 %v231, %v232
          %v234 = vrot.slane %v233, 2
          %v235 = vadd.f32 %v233, %v234
          %v236 = vrot.slane %v235, 1
          %v237 = vadd.f32 %v235, %v236
          %v238 = vsel %vm230, %v203, 0.0
          %v239 = vrot.slane %v238, 4
          %v240 = vadd.f32 %v238, %v239
          %v241 = vrot.slane %v240, 2
          %v242 = vadd.f32 %v240, %v241
          %v243 = vrot.slane %v242, 1
          %v244 = vadd.f32 %v242, %v243
          %v245 = vsel %vm230, %v202, 0.0
          %v246 = vrot.slane %v245, 4
          %v247 = vadd.f32 %v245, %v246
          %v248 = vrot.slane %v247, 2
          %v249 = vadd.f32 %v247, %v248
          %v250 = vrot.slane %v249, 1
          %v251 = vadd.f32 %v249, %v250
          %v252 = vsel %vm230, %v204, 0.0
          %v253 = vrot.slane %v252, 4
          %v254 = vadd.f32 %v252, %v253
          %v255 = vrot.slane %v254, 2
          %v256 = vadd.f32 %v254, %v255
          %v257 = vrot.slane %v256, 1
          %v258 = vadd.f32 %v256, %v257
          %v259 = vsel %vm230, %v212, 0.0
          %v260 = vrot.slane %v259, 4
          %v261 = vadd.f32 %v259, %v260
          %v262 = vrot.slane %v261, 2
          %v263 = vadd.f32 %v261, %v262
          %v264 = vrot.slane %v263, 1
          %v265 = vadd.f32 %v263, %v264
          %v266 = vsel %vm230, %v220, 0.0
          %v267 = vrot.slane %v266, 4
          %v268 = vadd.f32 %v266, %v267
          %v269 = vrot.slane %v268, 2
          %v270 = vadd.f32 %v268, %v269
          %v271 = vrot.slane %v270, 1
          %v272 = vadd.f32 %v270, %v271
          %v273 = vsel %vm230, %v219, 0.0
          %v274 = vrot.slane %v273, 4
          %v275 = vadd.f32 %v273, %v274
          %v276 = vrot.slane %v275, 2
          %v277 = vadd.f32 %v275, %v276
          %v278 = vrot.slane %v277, 1
          %v279 = vadd.f32 %v277, %v278
          %v280 = vsel %vm230, %v221, 0.0
          %v281 = vrot.slane %v280, 4
          %v282 = vadd.f32 %v280, %v281
          %v283 = vrot.slane %v282, 2
          %v284 = vadd.f32 %v282, %v283
          %v285 = vrot.slane %v284, 1
          %v286 = vadd.f32 %v284, %v285
          %v287 = vrcp.pop 2.0
          %v288 = vmul.f32 %v237, %v287
          %v289 = vmul.f32 %v244, %v287
          %v290 = vmul.f32 %v251, %v287
          %v291 = vmul.f32 %v258, %v287
          %v292 = vmul.f32 %v265, %v287
          %v293 = vmul.f32 %v272, %v287
          %v294 = vmul.f32 %v279, %v287
          %v295 = vmul.f32 %v286, %v287
          %v304 = vcombine.low %v288, %v289
          %v305 = vcombine.low %v290, %v291
          %v307 = vunpack.c.l.s4 1983009808
          %v308 = vunpack.c.0.s8 %v307
          %v309 = vlaneseq
          %v310 = vshrl.u32 %v309, 7
          %v311 = vsub.s32 %v308, %v310
          %v312 = vrot.slane %v304, %v311
          %v314 = vunpack.c.l.s4 1983009808
          %v315 = vunpack.c.0.s8 %v314
          %v316 = vlaneseq
          %v317 = vshrl.u32 %v316, 7
          %v318 = vsub.s32 %v315, %v317
          %v319 = vrot.slane %v305, %v318
          %v320 = vcombine.low %v312, %v319
          %v321 = vcombine.low %v292, %v293
          %v322 = vcombine.low %v294, %v295
          %v324 = vunpack.c.l.s4 1983009808
          %v325 = vunpack.c.0.s8 %v324
          %v326 = vlaneseq
          %v327 = vshrl.u32 %v326, 7
          %v328 = vsub.s32 %v325, %v327
          %v329 = vrot.slane %v321, %v328
          %v331 = vunpack.c.l.s4 1983009808
          %v332 = vunpack.c.0.s8 %v331
          %v333 = vlaneseq
          %v334 = vshrl.u32 %v333, 7
          %v335 = vsub.s32 %v332, %v334
          %v336 = vrot.slane %v322, %v335
          %v337 = vcombine.low %v329, %v336
          %v340 = vsub.f32 %v153, %v320
          %v341 = vsub.f32 %v154, %v337
          %v342 = vmul.f32 %v340, %v340
          %v343 = vmul.f32 %v341, %v341
          %v346 = vcombine.high %v342, %v342
          %v348 = vunpack.c.l.s4 1983009808
          %v349 = vunpack.c.0.s8 %v348
          %v350 = vlaneseq
          %v351 = vshrl.u32 %v350, 7
          %v352 = vsub.s32 %v349, %v351
          %v353 = vrot.slane %v342, %v352
          %v355 = vunpack.c.l.s4 1983009808
          %v356 = vunpack.c.0.s8 %v355
          %v357 = vlaneseq
          %v358 = vshrl.u32 %v357, 7
          %v359 = vsub.s32 %v356, %v358
          %v360 = vrot.slane %v346, %v359
          %v361 = vcombine.high %v353, %v353
          %v362 = vcombine.high %v360, %v360
          %v363 = vcombine.high %v343, %v343
          %v365 = vunpack.c.l.s4 1983009808
          %v366 = vunpack.c.0.s8 %v365
          %v367 = vlaneseq
          %v368 = vshrl.u32 %v367, 7
          %v369 = vsub.s32 %v366, %v368
          %v370 = vrot.slane %v343, %v369
          %v372 = vunpack.c.l.s4 1983009808
          %v373 = vunpack.c.0.s8 %v372
          %v374 = vlaneseq
          %v375 = vshrl.u32 %v374, 7
          %v376 = vsub.s32 %v373, %v375
          %v377 = vrot.slane %v363, %v376
          %v378 = vcombine.high %v370, %v370
          %v379 = vcombine.high %v377, %v377
          %v388 = vsel %vm230, %v353, 0.0
          %v389 = vrot.slane %v388, 4
          %v390 = vadd.f32 %v388, %v389
          %v391 = vrot.slane %v390, 2
          %v392 = vadd.f32 %v390, %v391
          %v393 = vrot.slane %v392, 1
          %v394 = vadd.f32 %v392, %v393
          %v395 = vsel %vm230, %v361, 0.0
          %v396 = vrot.slane %v395, 4
          %v397 = vadd.f32 %v395, %v396
          %v398 = vrot.slane %v397, 2
          %v399 = vadd.f32 %v397, %v398
          %v400 = vrot.slane %v399, 1
          %v401 = vadd.f32 %v399, %v400
          %v402 = vsel %vm230, %v360, 0.0
          %v403 = vrot.slane %v402, 4
          %v404 = vadd.f32 %v402, %v403
          %v405 = vrot.slane %v404, 2
          %v406 = vadd.f32 %v404, %v405
          %v407 = vrot.slane %v406, 1
          %v408 = vadd.f32 %v406, %v407
          %v409 = vsel %vm230, %v362, 0.0
          %v410 = vrot.slane %v409, 4
          %v411 = vadd.f32 %v409, %v410
          %v412 = vrot.slane %v411, 2
          %v413 = vadd.f32 %v411, %v412
          %v414 = vrot.slane %v413, 1
          %v415 = vadd.f32 %v413, %v414
          %v416 = vsel %vm230, %v370, 0.0
          %v417 = vrot.slane %v416, 4
          %v418 = vadd.f32 %v416, %v417
          %v419 = vrot.slane %v418, 2
          %v420 = vadd.f32 %v418, %v419
          %v421 = vrot.slane %v420, 1
          %v422 = vadd.f32 %v420, %v421
          %v423 = vsel %vm230, %v378, 0.0
          %v424 = vrot.slane %v423, 4
          %v425 = vadd.f32 %v423, %v424
          %v426 = vrot.slane %v425, 2
          %v427 = vadd.f32 %v425, %v426
          %v428 = vrot.slane %v427, 1
          %v429 = vadd.f32 %v427, %v428
          %v430 = vsel %vm230, %v377, 0.0
          %v431 = vrot.slane %v430, 4
          %v432 = vadd.f32 %v430, %v431
          %v433 = vrot.slane %v432, 2
          %v434 = vadd.f32 %v432, %v433
          %v435 = vrot.slane %v434, 1
          %v436 = vadd.f32 %v434, %v435
          %v437 = vsel %vm230, %v379, 0.0
          %v438 = vrot.slane %v437, 4
          %v439 = vadd.f32 %v437, %v438
          %v440 = vrot.slane %v439, 2
          %v441 = vadd.f32 %v439, %v440
          %v442 = vrot.slane %v441, 1
          %v443 = vadd.f32 %v441, %v442
          %v444 = vmul.f32 %v394, %v287
          %v445 = vmul.f32 %v401, %v287
          %v446 = vmul.f32 %v408, %v287
          %v447 = vmul.f32 %v415, %v287
          %v448 = vmul.f32 %v422, %v287
          %v449 = vmul.f32 %v429, %v287
          %v450 = vmul.f32 %v436, %v287
          %v451 = vmul.f32 %v443, %v287
          %v452 = vadd.f32 %v444, 1e-08
          %v453 = vadd.f32 %v445, 1e-08
          %v454 = vadd.f32 %v446, 1e-08
          %v455 = vadd.f32 %v447, 1e-08
          %v456 = vadd.f32 %v448, 1e-08
          %v457 = vadd.f32 %v449, 1e-08
          %v458 = vadd.f32 %v450, 1e-08
          %v459 = vadd.f32 %v451, 1e-08
          %v460 = vrsqrt.pop %v452
          %v461 = vmul.f32 %v452, %v460
          %vm462 = vcmp.eq.f32.partialorder %v452, inf
          %v463 = vsel %vm462, %v452, %v461
          %vm464 = vcmp.eq.f32.partialorder %v452, 0.0
          %v465 = vand.u32 %v452, 2147483648
          %v466 = vsel %vm464, %v465, %v463
          %v467 = vrsqrt.pop %v453
          %v468 = vmul.f32 %v453, %v467
          %vm469 = vcmp.eq.f32.partialorder %v453, inf
          %v470 = vsel %vm469, %v453, %v468
          %vm471 = vcmp.eq.f32.partialorder %v453, 0.0
          %v472 = vand.u32 %v453, 2147483648
          %v473 = vsel %vm471, %v472, %v470
          %v474 = vrsqrt.pop %v454
          %v475 = vmul.f32 %v454, %v474
          %vm476 = vcmp.eq.f32.partialorder %v454, inf
          %v477 = vsel %vm476, %v454, %v475
          %vm478 = vcmp.eq.f32.partialorder %v454, 0.0
          %v479 = vand.u32 %v454, 2147483648
          %v480 = vsel %vm478, %v479, %v477
          %v481 = vrsqrt.pop %v455
          %v482 = vmul.f32 %v455, %v481
          %vm483 = vcmp.eq.f32.partialorder %v455, inf
          %v484 = vsel %vm483, %v455, %v482
          %vm485 = vcmp.eq.f32.partialorder %v455, 0.0
          %v486 = vand.u32 %v455, 2147483648
          %v487 = vsel %vm485, %v486, %v484
          %v488 = vrsqrt.pop %v456
          %v489 = vmul.f32 %v456, %v488
          %vm490 = vcmp.eq.f32.partialorder %v456, inf
          %v491 = vsel %vm490, %v456, %v489
          %vm492 = vcmp.eq.f32.partialorder %v456, 0.0
          %v493 = vand.u32 %v456, 2147483648
          %v494 = vsel %vm492, %v493, %v491
          %v495 = vrsqrt.pop %v457
          %v496 = vmul.f32 %v457, %v495
          %vm497 = vcmp.eq.f32.partialorder %v457, inf
          %v498 = vsel %vm497, %v457, %v496
          %vm499 = vcmp.eq.f32.partialorder %v457, 0.0
          %v500 = vand.u32 %v457, 2147483648
          %v501 = vsel %vm499, %v500, %v498
          %v502 = vrsqrt.pop %v458
          %v503 = vmul.f32 %v458, %v502
          %vm504 = vcmp.eq.f32.partialorder %v458, inf
          %v505 = vsel %vm504, %v458, %v503
          %vm506 = vcmp.eq.f32.partialorder %v458, 0.0
          %v507 = vand.u32 %v458, 2147483648
          %v508 = vsel %vm506, %v507, %v505
          %v509 = vrsqrt.pop %v459
          %v510 = vmul.f32 %v459, %v509
          %vm511 = vcmp.eq.f32.partialorder %v459, inf
          %v512 = vsel %vm511, %v459, %v510
          %vm513 = vcmp.eq.f32.partialorder %v459, 0.0
          %v514 = vand.u32 %v459, 2147483648
          %v515 = vsel %vm513, %v514, %v512
          %v516 = vld [vmem:[#allocation2] sm:$0x1]
          %v517 = vsel %vm174, %v466, 0.0
          %v518 = vsel %vm175, %v473, 0.0
          %v519 = vsel %vm176, %v480, 0.0
          %v520 = vsel %vm177, %v487, 0.0
          %v521 = vsel %vm178, %v494, 0.0
          %v522 = vsel %vm179, %v501, 0.0
          %v523 = vsel %vm180, %v508, 0.0
          %v524 = vsel %vm181, %v515, 0.0
          %vm525 = vcmask 1040384
          %v526 = vsel %vm525, %v517, 0.0
          %v527 = vsel %vm525, %v518, 0.0
          %v528 = vadd.f32 %v526, %v527
          %v529 = vsel %vm525, %v519, 0.0
          %v530 = vadd.f32 %v528, %v529
          %v531 = vsel %vm525, %v520, 0.0
          %v532 = vadd.f32 %v530, %v531
          %v533 = vsel %vm525, %v521, 0.0
          %v534 = vadd.f32 %v532, %v533
          %v535 = vsel %vm525, %v522, 0.0
          %v536 = vadd.f32 %v534, %v535
          %v537 = vsel %vm525, %v523, 0.0
          %v538 = vadd.f32 %v536, %v537
          %v539 = vsel %vm525, %v524, 0.0
          %v540 = vadd.f32 %v538, %v539
          %541 = vadd.xlane.f32.xlu0 %v540
          %v542 = vpop.xlane.xlu0 %541
          %v543 = vrot.slane %v542, 4
          %v544 = vadd.f32 %v542, %v543
          %v545 = vrot.slane %v544, 2
          %v546 = vadd.f32 %v544, %v545
          %v547 = vrot.slane %v546, 1
          %v548 = vadd.f32 %v546, %v547
          %s549 = vtos %v548
          %v550 = vstv %s549
          %v551 = vadd.f32 %v516, %v550
          %vm552 = vcmask 0
          %553 = vst.msk [vmem:[#allocation2] sm:$0x1] %vm552, %v551
        $region36: #{tpu_custom_call.1} parent=23 // pred_fallthru
          _
        %v554 = vld [vmem:[#allocation2] sm:$0x1]
        %v555 = vmul.f32 %v554, 0.0009765625
        %v556 = vsel %vm174, 1, 0
        %v557 = vsel %vm175, 1, 0
        %v558 = vsel %vm176, 1, 0
        %v559 = vsel %vm177, 1, 0
        %v560 = vsel %vm178, 1, 0
        %v561 = vsel %vm179, 1, 0
        %v562 = vsel %vm180, 1, 0
        %v563 = vsel %vm181, 1, 0
        %vm564 = vcmp.eq.s32.totalorder %v556, 1
        %vm565 = vcmp.eq.s32.totalorder %v557, 1
        %vm566 = vcmp.eq.s32.totalorder %v558, 1
        %vm567 = vcmp.eq.s32.totalorder %v559, 1
        %vm568 = vcmp.eq.s32.totalorder %v560, 1
        %vm569 = vcmp.eq.s32.totalorder %v561, 1
        %vm570 = vcmp.eq.s32.totalorder %v562, 1
        %vm571 = vcmp.eq.s32.totalorder %v563, 1
        %v573 = vlaneseq
        %v574 = vshrl.u32 %v573, 7
        %v575 = vsub.s32 0, %v574
        %v576 = vrot.slane %v555, %v575
        %577 = vset.pattern.permute.xlu0 0
        %578 = vperm.xlu0 %577, %v576
        %v579 = vpop.permute.xlu0 %578
        %v583 = vcombine.high %v153, %v153
        %v585 = vunpack.c.l.s4 1983009808
        %v586 = vunpack.c.0.s8 %v585
        %v587 = vlaneseq
        %v588 = vshrl.u32 %v587, 7
        %v589 = vsub.s32 %v586, %v588
        %v590 = vrot.slane %v153, %v589
        %v592 = vunpack.c.l.s4 1983009808
        %v593 = vunpack.c.0.s8 %v592
        %v594 = vlaneseq
        %v595 = vshrl.u32 %v594, 7
        %v596 = vsub.s32 %v593, %v595
        %v597 = vrot.slane %v583, %v596
        %v598 = vcombine.high %v590, %v590
        %v599 = vcombine.high %v597, %v597
        %v600 = vcombine.high %v154, %v154
        %v602 = vunpack.c.l.s4 1983009808
        %v603 = vunpack.c.0.s8 %v602
        %v604 = vlaneseq
        %v605 = vshrl.u32 %v604, 7
        %v606 = vsub.s32 %v603, %v605
        %v607 = vrot.slane %v154, %v606
        %v609 = vunpack.c.l.s4 1983009808
        %v610 = vunpack.c.0.s8 %v609
        %v611 = vlaneseq
        %v612 = vshrl.u32 %v611, 7
        %v613 = vsub.s32 %v610, %v612
        %v614 = vrot.slane %v600, %v613
        %v615 = vcombine.high %v607, %v607
        %v616 = vcombine.high %v614, %v614
        %v625 = vsel %vm564, %v590, %v579
        %v626 = vsel %vm565, %v598, %v579
        %v627 = vsel %vm566, %v597, %v579
        %v628 = vsel %vm567, %v599, %v579
        %v629 = vsel %vm568, %v607, %v579
        %v630 = vsel %vm569, %v615, %v579
        %v631 = vsel %vm570, %v614, %v579
        %v632 = vsel %vm571, %v616, %v579
        %v641 = vcombine.low %v625, %v626
        %v642 = vcombine.low %v627, %v628
        %v644 = vunpack.c.l.s4 1983009808
        %v645 = vunpack.c.0.s8 %v644
        %v646 = vlaneseq
        %v647 = vshrl.u32 %v646, 7
        %v648 = vsub.s32 %v645, %v647
        %v649 = vrot.slane %v641, %v648
        %v651 = vunpack.c.l.s4 1983009808
        %v652 = vunpack.c.0.s8 %v651
        %v653 = vlaneseq
        %v654 = vshrl.u32 %v653, 7
        %v655 = vsub.s32 %v652, %v654
        %v656 = vrot.slane %v642, %v655
        %v657 = vcombine.low %v649, %v656
        %v658 = vcombine.low %v629, %v630
        %v659 = vcombine.low %v631, %v632
        %v661 = vunpack.c.l.s4 1983009808
        %v662 = vunpack.c.0.s8 %v661
        %v663 = vlaneseq
        %v664 = vshrl.u32 %v663, 7
        %v665 = vsub.s32 %v662, %v664
        %v666 = vrot.slane %v658, %v665
        %v668 = vunpack.c.l.s4 1983009808
        %v669 = vunpack.c.0.s8 %v668
        %v670 = vlaneseq
        %v671 = vshrl.u32 %v670, 7
        %v672 = vsub.s32 %v669, %v671
        %v673 = vrot.slane %v659, %v672
        %v674 = vcombine.low %v666, %v673
        %677 = vst [vmem:[%s138] sm:$0xff] %v657
        %678 = vst [vmem:[%s138 + $0x8] sm:$0xff] %v674
        %s679 = sand.u32 %s56, 1
        %s680 = scalar_lea.sflag [#allocation5], %s679
        %s681 = sand.u32 %s56, 1
        %s682 = smul.addr %s681, 16
        %s683 = scalar_lea.vmem [#allocation6], %s682
        // Predicated region
        $region37: #{tpu_custom_call.1} parent=23 // pred_check
          %p684 = pneg %p66
        $region38: #{tpu_custom_call.1} parent=23 // pred_check_branch
          %686 = sbr.rel (%p684) target = $region40
        $region39: #{tpu_custom_call.1} parent=23 // pred_region
          %s687 = smul.u32 8, %s18
          %s688 = ssub.s32 10, %s687
          %p689 = scmp.lt.s32.totalorder %s688, 8
          %s690 = scalar_select %p689, %s688, 8
          %s691 = smul.u32 32, %s690
          %s693 = ssub.s32 256, %s691
          %694 = vsyncadd %s680, %s693
          %p695 = scmp.ne.s32.totalorder 0, %s691
          %s696 = smul.addr %s687, 32
          %s697 = scalar_lea.hbm %s1, %s696
          %s698 = smul.u32 %s690, 2
          %s699 = sshll.u32 %s698, 4
          %s700 = sshll.u32 %s683, 4
          %s701 = int_to_ptr.vmem [resolvable:$true] %s700
          %703 = dma.vmem_to_hbm [thread:$0]  (%p695), %s701, %s699, %s697, %s680
        $region40: #{tpu_custom_call.1} parent=23 // pred_fallthru
          _
      $region24: #{tpu_custom_call.1} parent=5 // pred_fallthru
        _
      %p704 = scmp.le.s32.totalorder 2, %s13
      // Predicated region
      $region41: #{tpu_custom_call.1} parent=5 // pred_check
        %p705 = pneg %p704
      $region42: #{tpu_custom_call.1} parent=5 // pred_check_branch
        %707 = sbr.rel (%p705) target = $region44
      $region43: #{tpu_custom_call.1} parent=5 // pred_region
        %s708 = ssub.s32 %s13, 2
        // Predicated region
        $region45: #{tpu_custom_call.1} parent=43 // pred_check
          %p709 = pneg %p72
        $region46: #{tpu_custom_call.1} parent=43 // pred_check_branch
          %711 = sbr.rel (%p709) target = $region48
        $region47: #{tpu_custom_call.1} parent=43 // pred_region
          %s712 = sand.u32 %s57, 1
          %s713 = scalar_lea.sflag [#allocation5], %s712
          %s714 = sand.u32 %s57, 1
          %s715 = smul.addr %s714, 16
          %s716 = scalar_lea.vmem [#allocation6], %s715
          %717 = dma.done %s713, 256
        $region48: #{tpu_custom_call.1} parent=43 // pred_fallthru
          _
      $region44: #{tpu_custom_call.1} parent=5 // pred_fallthru
        _
    $region6: #{tpu_custom_call.1} parent=1 // loop_footer
      %s17 = sadd.s32 1, %s13
    $region7: #{tpu_custom_call.1} parent=1 // loop_footer_branch
      %12 = sbr.rel target = $region3
    $region8: #{tpu_custom_call.1} parent=1 // loop_exit
      _
    %718 = vsyncpa [#allocation4], 1
    %s719 = scalar_lea.sflag [#allocation4], 1
    %720 = vsyncpa %s719, 1
    %721 = vsyncpa [#allocation5], 1
    %s722 = scalar_lea.sflag [#allocation5], 1
    %723 = vsyncpa %s722, 1

</llo_original>
